<compile_context>
chip_gen: v6e
topology: v6e:2x2x1
jax: 0.10.0
libtpu: 0.0.40
codegen_flags: <defaults>
</compile_context>

<pallas_src>
import jax
import jax.numpy as jnp
from jax.experimental import pallas as pl
from jax.experimental.pallas import tpu as pltpu

COUNT_OF_INGRS = 32   # stand-in for datas.countOfIngrs
HIDDEN = 64
TILE_B = 4096         # batch columns per grid step (VMEM-safe on v5e/v6e/v7x)


def _round_up(n, m):
    return ((n + m - 1) // m) * m


def _mlp_kernel(xt_ref, w1t_ref, w2t_ref, w3_ref, b1_ref, b2_ref, b3_ref,
                o_ref):
    """One batch tile of the fused MLP, batch-on-lanes (BN folded wrapper-side).

    xt_ref : (F, tile)  bf16   x^T block (batch on the lane axis)
    w1t_ref: (H, F)     bf16   W1^T
    w2t_ref: (H, H)     bf16   (s1 * W2)^T        (BN1 folded)
    w3_ref : (H, 1)     f32    s2 * w3 column      (BN2 folded, VPU path)
    b1_ref : (H, 1)     f32    b1^T
    b2_ref : (H, 1)     f32    (t1 @ W2 + b2)^T
    b3_ref : (1, 1)     f32    t2 @ w3 + b3        (SMEM scalar)
    o_ref  : (1, tile)  f32    output row (lane-dense)
    """
    xt = xt_ref[...]                                          # (F, tile) bf16

    # layer_1 + ReLU   (batch fills the MXU's N=256 columns)
    h = jnp.dot(w1t_ref[...], xt, preferred_element_type=jnp.float32)
    h = jnp.maximum(h + b1_ref[...], 0.0)                     # (H, tile) f32

    # layer_2 + ReLU   (BN1 folded into weights/bias)
    h = jnp.dot(w2t_ref[...], h.astype(w2t_ref.dtype),
                preferred_element_type=jnp.float32)
    h = jnp.maximum(h + b2_ref[...], 0.0)                     # (H, tile) f32

    # dropout(p=0.1) -> identity in eval mode
    # layer_out (BN2 folded): N=1 mat-vec done on VPU + XLU sublane-reduce,
    # keeping the MXU slot free.  Result is already lane-dense (1, tile).
    o_ref[...] = (jnp.sum(h * w3_ref[...], axis=0, keepdims=True)
                  + b3_ref[0, 0])


def _fold_params(params, compute_dtype=jnp.bfloat16):
    """Fold BN scale/shift (applied after ReLU) into the next linear, and
    transpose everything for the batch-on-lanes kernel.

    (h * s + t) @ W + b  ==  h @ (s.T * W) + (t @ W + b)
    """
    (w1, b1, s1, t1, w2, b2, s2, t2, w3, b3) = params
    w2f = s1.reshape(-1, 1) * w2                  # (H, H)
    b2f = t1 @ w2 + b2                            # (1, H)
    w3f = s2.reshape(-1, 1) * w3                  # (H, 1)
    b3f = t2 @ w3 + b3                            # (1, 1)
    return (w1.T.astype(compute_dtype),           # (H, F)  bf16
            w2f.T.astype(compute_dtype),          # (H, H)  bf16
            w3f.astype(jnp.float32),              # (H, 1)  f32  (VPU path)
            b1.T.astype(jnp.float32),             # (H, 1)  f32
            b2f.T.astype(jnp.float32),            # (H, 1)  f32
            b3f.astype(jnp.float32))              # (1, 1)  f32  (SMEM)


def binary_classification_forward(x, params, *, tile_b=TILE_B):
    """x: (B, COUNT_OF_INGRS) float32 -> (B, 1) float32 (eval-mode forward)."""
    B, F = x.shape
    w1t, w2t, w3f, b1t, b2t, b3f = _fold_params(params)

    # Batch tile: multiple of 256 (lane-dense output, clean MXU/lane tiling);
    # for B large enough, choose tile so nb >= 2 and the single "parallel"
    # grid axis can shard across both v7x TensorCores (no-op on v5e/v6e).
    b_ceil = _round_up(max(B, 1), 256)
    tile = min(tile_b, _round_up(pl.cdiv(b_ceil, 2), 256))
    nb = pl.cdiv(B, tile)
    b_pad = nb * tile

    # Single fused XLA relayout pass: pad tail rows + bf16 cast + transpose
    # to the (F, b_pad) batch-on-lanes layout the kernel consumes.
    xt = jnp.pad(x, ((0, b_pad - B), (0, 0))).astype(jnp.bfloat16).T

    out = pl.pallas_call(
        _mlp_kernel,
        out_shape=jax.ShapeDtypeStruct((1, b_pad), jnp.float32),
        grid=(nb,),
        in_specs=[
            # streamed per grid step (batch on lanes)
            pl.BlockSpec((F, tile), lambda i: (0, i)),
            # weights/biases: constant index_map -> resident across steps
            pl.BlockSpec((HIDDEN, F), lambda i: (0, 0)),
            pl.BlockSpec((HIDDEN, HIDDEN), lambda i: (0, 0)),
            pl.BlockSpec((HIDDEN, 1), lambda i: (0, 0)),
            pl.BlockSpec((HIDDEN, 1), lambda i: (0, 0)),
            pl.BlockSpec((HIDDEN, 1), lambda i: (0, 0)),
            # scalar output bias lives in SMEM
            pl.BlockSpec(memory_space=pltpu.MemorySpace.SMEM),
        ],
        out_specs=pl.BlockSpec((1, tile), lambda i: (0, i)),
        compiler_params=pltpu.CompilerParams(
            dimension_semantics=("parallel",)),
    )(xt, w1t, w2t, w3f, b1t, b2t, b3f)

    # Padded tail columns hold garbage-free but meaningless values; slice off.
    return out[0, :B].reshape(B, 1)


def init_params(key):
    """Deterministic init mirroring PyTorch shapes; weights stored (in, out).

    BatchNorm running stats / affine params are NON-trivial so the BN folding
    is actually exercised by the checks below.
    """
    ks = jax.random.split(key, 14)

    def linear_init(kw, kb, fan_in, fan_out):
        bound = 1.0 / jnp.sqrt(fan_in)
        w = jax.random.uniform(kw, (fan_in, fan_out), jnp.float32, -bound, bound)
        b = jax.random.uniform(kb, (1, fan_out), jnp.float32, -bound, bound)
        return w, b

    w1, b1 = linear_init(ks[0], ks[1], COUNT_OF_INGRS, HIDDEN)
    w2, b2 = linear_init(ks[2], ks[3], HIDDEN, HIDDEN)
    w3, b3 = linear_init(ks[4], ks[5], HIDDEN, 1)

    eps = 1e-5

    def bn_fold(kg, kb_, km, kv):
        gamma = jax.random.uniform(kg, (1, HIDDEN), jnp.float32, 0.5, 1.5)
        beta = 0.1 * jax.random.normal(kb_, (1, HIDDEN), jnp.float32)
        running_mean = 0.1 * jax.random.normal(km, (1, HIDDEN), jnp.float32)
        running_var = jax.random.uniform(kv, (1, HIDDEN), jnp.float32, 0.5, 1.5)
        scale = gamma / jnp.sqrt(running_var + eps)
        shift = beta - running_mean * scale
        return scale, shift

    s1, t1 = bn_fold(ks[6], ks[7], ks[8], ks[9])
    s2, t2 = bn_fold(ks[10], ks[11], ks[12], ks[13])

    return (w1, b1, s1, t1, w2, b2, s2, t2, w3, b3)


if __name__ == "__main__":
    key = jax.random.PRNGKey(0)
    kx, kp = jax.random.split(key)

    B = 8
    x = jax.random.normal(kx, (B, COUNT_OF_INGRS), jnp.float32)
    params = init_params(kp)

    out = jax.block_until_ready(binary_classification_forward(x, params))
    assert out.shape == (B, 1)

    # Reference 1: mirror the kernel's folded bf16 transposed math in pure JAX.
    w1t, w2t, w3f, b1t, b2t, b3f = _fold_params(params)
    xt = x.astype(jnp.bfloat16).T
    h = jnp.dot(w1t, xt, preferred_element_type=jnp.float32)
    h = jnp.maximum(h + b1t, 0.0)
    h = jnp.dot(w2t, h.astype(jnp.bfloat16), preferred_element_type=jnp.float32)
    h = jnp.maximum(h + b2t, 0.0)
    ref = (jnp.sum(h * w3f, axis=0, keepdims=True) + b3f[0, 0])[0].reshape(B, 1)
    assert jnp.allclose(out, ref, atol=2e-3, rtol=2e-3)

    # Reference 2: original unfolded f32 eval-mode math (loose tol: bf16 cast).
    (w1, b1, s1, t1, w2, b2, s2, t2, w3, b3) = params
    h32 = jnp.maximum(x @ w1 + b1, 0.0) * s1 + t1
    h32 = jnp.maximum(h32 @ w2 + b2, 0.0) * s2 + t2
    ref32 = h32 @ w3 + b3
    assert jnp.allclose(out, ref32, atol=1e-1, rtol=1e-1)

    print("KERNEL_OK")
</pallas_src>

<mosaic_0001>
module attributes {stable_mosaic.version = 11 : i64} {
  func.func @_mlp_kernel(%arg0: i32, %arg1: memref<32x256xbf16, #tpu.memory_space<vmem>>, %arg2: memref<64x32xbf16, #tpu.memory_space<vmem>>, %arg3: memref<64x64xbf16, #tpu.memory_space<vmem>>, %arg4: memref<64x1xf32, #tpu.memory_space<vmem>>, %arg5: memref<64x1xf32, #tpu.memory_space<vmem>>, %arg6: memref<64x1xf32, #tpu.memory_space<vmem>>, %arg7: memref<1x1xf32, #tpu.memory_space<smem>>, %arg8: memref<1x256xf32, #tpu.memory_space<vmem>>) attributes {dimension_semantics = [#tpu.dimension_semantics<parallel>], iteration_bounds = array<i64: 1>, scalar_prefetch = 0 : i64, scratch_operands = 0 : i64, tpu.core_type = #tpu.core_type<tc>, window_params = [{transform_indices = @transform_0, window_bounds = array<i64: 32, 256>}, {pipeline_mode = #tpu.pipeline_mode<synchronous>, transform_indices = @transform_1, window_bounds = array<i64: 64, 32>}, {pipeline_mode = #tpu.pipeline_mode<synchronous>, transform_indices = @transform_2, window_bounds = array<i64: 64, 64>}, {pipeline_mode = #tpu.pipeline_mode<synchronous>, transform_indices = @transform_3, window_bounds = array<i64: 64, 1>}, {pipeline_mode = #tpu.pipeline_mode<synchronous>, transform_indices = @transform_4, window_bounds = array<i64: 64, 1>}, {pipeline_mode = #tpu.pipeline_mode<synchronous>, transform_indices = @transform_5, window_bounds = array<i64: 64, 1>}, {transform_indices = @transform_6, window_bounds = array<i64: 1, 1>}, {transform_indices = @transform_7, window_bounds = array<i64: 1, 256>}]} {
    %c0 = arith.constant 0 : index
    %c0_0 = arith.constant 0 : index
    %0 = vector.load %arg1[%c0, %c0_0] : memref<32x256xbf16, #tpu.memory_space<vmem>>, vector<32x256xbf16>
    %c0_1 = arith.constant 0 : index
    %c0_2 = arith.constant 0 : index
    %1 = vector.load %arg2[%c0_1, %c0_2] : memref<64x32xbf16, #tpu.memory_space<vmem>>, vector<64x32xbf16>
    %cst = arith.constant dense<0.000000e+00> : vector<64x256xf32>
    %2 = tpu.matmul %1, %0, %cst {dimension_numbers = #tpu.dot_dimension_numbers<[1], [0], [0], [1], [0, 0, 1, 1], [], []>} : vector<64x32xbf16>, vector<32x256xbf16>, vector<64x256xf32> -> vector<64x256xf32>
    %c0_3 = arith.constant 0 : index
    %c0_4 = arith.constant 0 : index
    %3 = vector.load %arg5[%c0_3, %c0_4] : memref<64x1xf32, #tpu.memory_space<vmem>>, vector<64x1xf32>
    %4 = vector.broadcast %3 : vector<64x1xf32> to vector<64x256xf32>
    %5 = arith.addf %2, %4 : vector<64x256xf32>
    %cst_5 = arith.constant 0.000000e+00 : f32
    %6 = vector.broadcast %cst_5 : f32 to vector<64x256xf32>
    %7 = arith.maximumf %5, %6 : vector<64x256xf32>
    %c0_6 = arith.constant 0 : index
    %c0_7 = arith.constant 0 : index
    %8 = vector.load %arg3[%c0_6, %c0_7] : memref<64x64xbf16, #tpu.memory_space<vmem>>, vector<64x64xbf16>
    %9 = arith.truncf %7 : vector<64x256xf32> to vector<64x256xbf16>
    %cst_8 = arith.constant dense<0.000000e+00> : vector<64x256xf32>
    %10 = tpu.matmul %8, %9, %cst_8 {dimension_numbers = #tpu.dot_dimension_numbers<[1], [0], [0], [1], [0, 0, 1, 1], [], []>} : vector<64x64xbf16>, vector<64x256xbf16>, vector<64x256xf32> -> vector<64x256xf32>
    %c0_9 = arith.constant 0 : index
    %c0_10 = arith.constant 0 : index
    %11 = vector.load %arg6[%c0_9, %c0_10] : memref<64x1xf32, #tpu.memory_space<vmem>>, vector<64x1xf32>
    %12 = vector.broadcast %11 : vector<64x1xf32> to vector<64x256xf32>
    %13 = arith.addf %10, %12 : vector<64x256xf32>
    %cst_11 = arith.constant 0.000000e+00 : f32
    %14 = vector.broadcast %cst_11 : f32 to vector<64x256xf32>
    %15 = arith.maximumf %13, %14 : vector<64x256xf32>
    %c0_12 = arith.constant 0 : index
    %c0_13 = arith.constant 0 : index
    %16 = vector.load %arg4[%c0_12, %c0_13] : memref<64x1xf32, #tpu.memory_space<vmem>>, vector<64x1xf32>
    %17 = vector.broadcast %16 : vector<64x1xf32> to vector<64x256xf32>
    %18 = arith.mulf %15, %17 : vector<64x256xf32>
    %cst_14 = arith.constant dense<0.000000e+00> : vector<256xf32>
    %19 = vector.multi_reduction <add>, %18, %cst_14 [0] : vector<64x256xf32> to vector<256xf32>
    %20 = vector.shape_cast %19 : vector<256xf32> to vector<1x256xf32>
    %c0_15 = arith.constant 0 : index
    %c0_16 = arith.constant 0 : index
    %21 = memref.load %arg7[%c0_15, %c0_16] : memref<1x1xf32, #tpu.memory_space<smem>>
    %22 = vector.broadcast %21 : f32 to vector<1x256xf32>
    %23 = arith.addf %20, %22 : vector<1x256xf32>
    %c0_17 = arith.constant 0 : index
    %c0_18 = arith.constant 0 : index
    %24 = vector.load %arg8[%c0_17, %c0_18] : memref<1x256xf32, #tpu.memory_space<vmem>>, vector<1x256xf32>
    tpu.vector_store %arg8[%c0_17, %c0_18], %23 {strides = array<i32>} : memref<1x256xf32, #tpu.memory_space<vmem>>, vector<1x256xf32>,
    return
  }
  func.func @transform_0(%arg0: i32) -> (i32, i32) {
    %c0_i32 = arith.constant 0 : i32
    %c0_i32_0 = arith.constant 0 : i32
    return %c0_i32, %arg0 : i32, i32
  }
  func.func @transform_1(%arg0: i32) -> (i32, i32) {
    %c0_i32 = arith.constant 0 : i32
    %c0_i32_0 = arith.constant 0 : i32
    %c0_i32_1 = arith.constant 0 : i32
    return %c0_i32, %c0_i32_0 : i32, i32
  }
  func.func @transform_2(%arg0: i32) -> (i32, i32) {
    %c0_i32 = arith.constant 0 : i32
    %c0_i32_0 = arith.constant 0 : i32
    %c0_i32_1 = arith.constant 0 : i32
    return %c0_i32, %c0_i32_0 : i32, i32
  }
  func.func @transform_3(%arg0: i32) -> (i32, i32) {
    %c0_i32 = arith.constant 0 : i32
    %c0_i32_0 = arith.constant 0 : i32
    %c0_i32_1 = arith.constant 0 : i32
    return %c0_i32, %c0_i32_0 : i32, i32
  }
  func.func @transform_4(%arg0: i32) -> (i32, i32) {
    %c0_i32 = arith.constant 0 : i32
    %c0_i32_0 = arith.constant 0 : i32
    %c0_i32_1 = arith.constant 0 : i32
    return %c0_i32, %c0_i32_0 : i32, i32
  }
  func.func @transform_5(%arg0: i32) -> (i32, i32) {
    %c0_i32 = arith.constant 0 : i32
    %c0_i32_0 = arith.constant 0 : i32
    %c0_i32_1 = arith.constant 0 : i32
    return %c0_i32, %c0_i32_0 : i32, i32
  }
  func.func @transform_6(%arg0: i32) -> (i32, i32) {
    %c0_i32 = arith.constant 0 : i32
    %c0_i32_0 = arith.constant 0 : i32
    %c0_i32_1 = arith.constant 0 : i32
    return %c0_i32, %c0_i32_0 : i32, i32
  }
  func.func @transform_7(%arg0: i32) -> (i32, i32) {
    %c0_i32 = arith.constant 0 : i32
    %c0_i32_0 = arith.constant 0 : i32
    return %c0_i32, %arg0 : i32, i32
  }
}

</mosaic_0001>

<llo_original>
// kernel: tpu_custom_call.1
$region0: #{tpu_custom_call.1}
  #allocation0 [shape = 'u32[]', space=smem, size = 0x4, offset = 0x4, fixed_abs, tag = 'smem constant byte address 0x4 - core index']
  #allocation1 [shape = 'u32[144,128]{1,0:T(1,128)}', space=vmem, size = 0x12000, scoped, tag = 'internal scratch']
  #allocation2 [shape = 'f32[1,1]{1,0:T(1,128)S(6)}', space=smem, size = 0x200, scoped, tag = 'scoped memory for tpu_custom_call.1']
  %s0 = inlined_call_operand.vmem [shape: bf16[32,256], index: 0, kind: input, shape index: {}]
  %s1 = inlined_call_operand.vmem [shape: bf16[64,32], index: 1, kind: input, shape index: {}]
  %s2 = inlined_call_operand.vmem [shape: bf16[64,64], index: 2, kind: input, shape index: {}]
  %s3 = inlined_call_operand.vmem [shape: f32[64,1], index: 3, kind: input, shape index: {}]
  %s4 = inlined_call_operand.vmem [shape: f32[64,1], index: 4, kind: input, shape index: {}]
  %s5 = inlined_call_operand.vmem [shape: f32[64,1], index: 5, kind: input, shape index: {}]
  %s6 = inlined_call_operand.<no memory space> [shape: f32[1,1], index: 6, kind: input, shape index: {}]
  %s7 = inlined_call_operand.hbm [shape: f32[1,256], index: 7, kind: output, shape index: {}]
  %s8 = sld [smem:[#allocation0]]
  $region38: #{tpu_custom_call.1} parent=0
    _
  %s10 = ssub.s32 1, %s8
  %s11 = scalar_select 0, %s10, %s8
  %12 = sst [smem:[#allocation2]] %s6
  $region1: #{tpu_custom_call.1} parent=0
    #allocation3 [shape = 'u8[1024]{0}', space=vmem, size = 0x400, scoped, tag = 'output window, operand 0, single buffered']
    #allocation4 [shape = 's32[1]{0}', space=sflag, size = 0x4, scoped, tag = 'scoped memory for tpu_custom_call.1']
    %13 = vsyncpa [#allocation4], 0
    // Predicated region
    $region2: #{tpu_custom_call.1} parent=1 // pred_check
      _
    $region3: #{tpu_custom_call.1} parent=1 // pred_check_branch
      %15 = sbr.rel (0) target = $region5
    $region4: #{tpu_custom_call.1} parent=1 // pred_region
      _
    $region5: #{tpu_custom_call.1} parent=1 // pred_fallthru
      _
    // Predicated region
    $region6: #{tpu_custom_call.1} parent=1 // pred_check
      _
    $region7: #{tpu_custom_call.1} parent=1 // pred_check_branch
      %17 = sbr.rel (0) target = $region9
    $region8: #{tpu_custom_call.1} parent=1 // pred_region
      _
    $region9: #{tpu_custom_call.1} parent=1 // pred_fallthru
      _
    // Predicated region
    $region10: #{tpu_custom_call.1} parent=1 // pred_check
      _
    $region11: #{tpu_custom_call.1} parent=1 // pred_check_branch
      %19 = sbr.rel (0) target = $region13
    $region12: #{tpu_custom_call.1} parent=1 // pred_region
      _
    $region13: #{tpu_custom_call.1} parent=1 // pred_fallthru
      _
    // Predicated region
    $region14: #{tpu_custom_call.1} parent=1 // pred_check
      _
    $region15: #{tpu_custom_call.1} parent=1 // pred_check_branch
      %21 = sbr.rel (0) target = $region17
    $region16: #{tpu_custom_call.1} parent=1 // pred_region
      _
    $region17: #{tpu_custom_call.1} parent=1 // pred_fallthru
      _
    // Predicated region
    $region18: #{tpu_custom_call.1} parent=1 // pred_check
      _
    $region19: #{tpu_custom_call.1} parent=1 // pred_check_branch
      %23 = sbr.rel (0) target = $region21
    $region20: #{tpu_custom_call.1} parent=1 // pred_region
      _
    $region21: #{tpu_custom_call.1} parent=1 // pred_fallthru
      _
    // Predicated region
    $region22: #{tpu_custom_call.1} parent=1 // pred_check
      _
    $region23: #{tpu_custom_call.1} parent=1 // pred_check_branch
      %25 = sbr.rel (0) target = $region25
    $region24: #{tpu_custom_call.1} parent=1 // pred_region
      _
    $region25: #{tpu_custom_call.1} parent=1 // pred_fallthru
      _
    // Predicated region
    $region26: #{tpu_custom_call.1} parent=1 // pred_check
      _
    $region27: #{tpu_custom_call.1} parent=1 // pred_check_branch
      %27 = sbr.rel (0) target = $region29
    $region28: #{tpu_custom_call.1} parent=1 // pred_region
      _
    $region29: #{tpu_custom_call.1} parent=1 // pred_fallthru
      _
    %v29 = vld [vmem:[%s0] sm:$0xff]
    %v30 = vld [vmem:[%s0 + $0x8] sm:$0xff]
    %v31 = vld [vmem:[%s0 + $0x10] sm:$0xff]
    %v32 = vld [vmem:[%s0 + $0x18] sm:$0xff]
    %v33 = vld [vmem:[%s1] sm:$0xf]
    %v34 = vld [vmem:[%s1 + $0x4] sm:$0xf]
    %v35 = vld [vmem:[%s1 + $0x8] sm:$0xf]
    %v36 = vld [vmem:[%s1 + $0xc] sm:$0xf]
    %v37 = vld [vmem:[%s1 + $0x10] sm:$0xf]
    %v38 = vld [vmem:[%s1 + $0x14] sm:$0xf]
    %v39 = vld [vmem:[%s1 + $0x18] sm:$0xf]
    %v40 = vld [vmem:[%s1 + $0x1c] sm:$0xf]
    %v41 = vld [vmem:[%s4] sm:$0xff]
    %v42 = vld [vmem:[%s4 + $0x8] sm:$0xff]
    %v43 = vld [vmem:[%s4 + $0x10] sm:$0xff]
    %v44 = vld [vmem:[%s4 + $0x18] sm:$0xff]
    %v45 = vld [vmem:[%s4 + $0x20] sm:$0xff]
    %v46 = vld [vmem:[%s4 + $0x28] sm:$0xff]
    %v47 = vld [vmem:[%s4 + $0x30] sm:$0xff]
    %v48 = vld [vmem:[%s4 + $0x38] sm:$0xff]
    %50 = vset.pattern.permute.xlu0 0
    %51 = vperm.xlu0 %50, %v41
    %v52 = vpop.permute.xlu0 %51
    %55 = vset.pattern.permute.xlu0 0
    %56 = vperm.xlu0 %55, %v42
    %v57 = vpop.permute.xlu0 %56
    %60 = vset.pattern.permute.xlu0 0
    %61 = vperm.xlu0 %60, %v43
    %v62 = vpop.permute.xlu0 %61
    %65 = vset.pattern.permute.xlu0 0
    %66 = vperm.xlu0 %65, %v44
    %v67 = vpop.permute.xlu0 %66
    %70 = vset.pattern.permute.xlu0 0
    %71 = vperm.xlu0 %70, %v45
    %v72 = vpop.permute.xlu0 %71
    %75 = vset.pattern.permute.xlu0 0
    %76 = vperm.xlu0 %75, %v46
    %v77 = vpop.permute.xlu0 %76
    %80 = vset.pattern.permute.xlu0 0
    %81 = vperm.xlu0 %80, %v47
    %v82 = vpop.permute.xlu0 %81
    %85 = vset.pattern.permute.xlu0 0
    %86 = vperm.xlu0 %85, %v48
    %v87 = vpop.permute.xlu0 %86
    %v97 = vunpack.c.l.b16 %v33
    %v98 = vunpack.c.l.b16 %v34
    %v99 = vunpack.c.l.b16 %v35
    %v100 = vunpack.c.l.b16 %v36
    %v101 = vunpack.c.l.b16 %v37
    %v102 = vunpack.c.l.b16 %v38
    %v103 = vunpack.c.l.b16 %v39
    %v104 = vunpack.c.l.b16 %v40
    %v105 = vpack.c.b16 %v98, %v97
    %v106 = vpack.c.b16 %v100, %v99
    %v107 = vpack.c.b16 %v102, %v101
    %v108 = vpack.c.b16 %v104, %v103
    %v113 = vunpack.c.l.b16 %v29
    %v114 = vunpack.c.h.b16 %v29
    %v115 = vunpack.c.l.b16 %v30
    %v116 = vunpack.c.h.b16 %v30
    %v117 = vunpack.c.l.b16 %v31
    %v118 = vunpack.c.h.b16 %v31
    %v119 = vunpack.c.l.b16 %v32
    %v120 = vunpack.c.h.b16 %v32
    %v121 = vpack.c.b16 %v115, %v113
    %v122 = vpack.c.b16 %v116, %v114
    %v123 = vpack.c.b16 %v119, %v117
    %v124 = vpack.c.b16 %v120, %v118
    %vm129 = vcmask 261120
    %v131 = vsel %vm129, %v105, 0
    %v134 = vsel %vm129, %v106, 0
    %v137 = vsel %vm129, %v107, 0
    %v140 = vsel %vm129, %v108, 0
    %142 = vmatprep.subr.bf16.mxu0 0
    %143 = vmatpush1.bf16.msra.mxu0 0
    %144 = vmatprep.subr.bf16.mxu0 0
    %145 = vmatpush1.bf16.msra.mxu0 0
    %146 = vmatprep.subr.bf16.mxu0 0
    %147 = vmatpush1.bf16.msra.mxu0 0
    %148 = vmatprep.subr.bf16.mxu0 0
    %149 = vmatpush1.bf16.msra.mxu0 0
    %150 = vmatprep.subr.bf16.mxu0 0
    %151 = vmatpush1.bf16.msra.mxu0 0
    %152 = vmatprep.subr.bf16.mxu0 0
    %153 = vmatpush1.bf16.msra.mxu0 0
    %154 = vmatprep.subr.bf16.mxu0 %v124
    %155 = vmatpush1.bf16.msra.mxu0 %v123
    %156 = vmatprep.subr.bf16.mxu0 %v122
    %157 = vmatpush1.bf16.msra.mxu0 %v121
    %158 = vmatprep.subr.bf16.mxu0 0
    %159 = vmatpush2.bf16.msra.mxu0 0
    %160 = vmatprep.subr.bf16.mxu0 0
    %161 = vmatpush2.bf16.msra.mxu0 0
    %162 = vmatprep.subr.bf16.mxu0 0
    %163 = vmatpush2.bf16.msra.mxu0 0
    %164 = vmatprep.subr.bf16.mxu0 0
    %165 = vmatpush2.bf16.msra.mxu0 0
    %166 = vmatprep.subr.bf16.mxu0 0
    %167 = vmatpush2.bf16.msra.mxu0 0
    %168 = vmatprep.subr.bf16.mxu0 0
    %169 = vmatpush2.bf16.msra.mxu0 0
    %170 = vmatprep.subr.bf16.mxu0 0
    %171 = vmatpush2.bf16.msra.mxu0 0
    %172 = vmatprep.subr.bf16.mxu0 0
    %173 = vmatpush2.bf16.msra.mxu0 0
    %174 = vmatprep.mubr.bf16.mxu0 0
    %175 = vmatmul.mubr.bf16.gmra.mxu0 %v131
    %v176 = vpop.f32.mrf.mxu0
    %v177 = vadd.f32 %v52, %v176
    %v178 = vpop.f32.mrf.mxu0
    %v179 = vadd.f32 %v52, %v178
    %v180 = vpop.f32.mrf.mxu0
    %v181 = vadd.f32 %v57, %v180
    %v182 = vpop.f32.mrf.mxu0
    %v183 = vadd.f32 %v57, %v182
    %184 = vmatprep.mubr.bf16.mxu0 0
    %185 = vmatmul.mubr.bf16.gmra.mxu0 %v134
    %v186 = vpop.f32.mrf.mxu0
    %v187 = vadd.f32 %v62, %v186
    %v188 = vpop.f32.mrf.mxu0
    %v189 = vadd.f32 %v62, %v188
    %v190 = vpop.f32.mrf.mxu0
    %v191 = vadd.f32 %v67, %v190
    %v192 = vpop.f32.mrf.mxu0
    %v193 = vadd.f32 %v67, %v192
    %194 = vmatprep.mubr.bf16.mxu0 0
    %195 = vmatmul.mubr.bf16.gmra.mxu0 %v137
    %v196 = vpop.f32.mrf.mxu0
    %v197 = vadd.f32 %v72, %v196
    %v198 = vpop.f32.mrf.mxu0
    %v199 = vadd.f32 %v72, %v198
    %v200 = vpop.f32.mrf.mxu0
    %v201 = vadd.f32 %v77, %v200
    %v202 = vpop.f32.mrf.mxu0
    %v203 = vadd.f32 %v77, %v202
    %204 = vmatprep.mubr.bf16.mxu0 0
    %205 = vmatmul.mubr.bf16.gmra.mxu0 %v140
    %v206 = vpop.f32.mrf.mxu0
    %v207 = vadd.f32 %v82, %v206
    %v208 = vpop.f32.mrf.mxu0
    %v209 = vadd.f32 %v82, %v208
    %v210 = vpop.f32.mrf.mxu0
    %v211 = vadd.f32 %v87, %v210
    %v212 = vpop.f32.mrf.mxu0
    %v213 = vadd.f32 %v87, %v212
    %214 = vdwg.mxu0
    %v215 = vmax.f32 %v177, 0.0
    %v216 = vmax.f32 %v179, 0.0
    %v217 = vmax.f32 %v181, 0.0
    %v218 = vmax.f32 %v183, 0.0
    %v219 = vmax.f32 %v187, 0.0
    %v220 = vmax.f32 %v189, 0.0
    %v221 = vmax.f32 %v191, 0.0
    %v222 = vmax.f32 %v193, 0.0
    %v223 = vmax.f32 %v197, 0.0
    %v224 = vmax.f32 %v199, 0.0
    %v225 = vmax.f32 %v201, 0.0
    %v226 = vmax.f32 %v203, 0.0
    %v227 = vmax.f32 %v207, 0.0
    %v228 = vmax.f32 %v209, 0.0
    %v229 = vmax.f32 %v211, 0.0
    %v230 = vmax.f32 %v213, 0.0
    %v231 = vld [vmem:[%s2] sm:$0xf]
    %v232 = vld [vmem:[%s2 + $0x4] sm:$0xf]
    %v233 = vld [vmem:[%s2 + $0x8] sm:$0xf]
    %v234 = vld [vmem:[%s2 + $0xc] sm:$0xf]
    %v235 = vld [vmem:[%s2 + $0x10] sm:$0xf]
    %v236 = vld [vmem:[%s2 + $0x14] sm:$0xf]
    %v237 = vld [vmem:[%s2 + $0x18] sm:$0xf]
    %v238 = vld [vmem:[%s2 + $0x1c] sm:$0xf]
    %v239 = vpack.c.bf16 %v217, %v215
    %v240 = vpack.c.bf16 %v218, %v216
    %v241 = vpack.c.bf16 %v221, %v219
    %v242 = vpack.c.bf16 %v222, %v220
    %v243 = vpack.c.bf16 %v225, %v223
    %v244 = vpack.c.bf16 %v226, %v224
    %v245 = vpack.c.bf16 %v229, %v227
    %v246 = vpack.c.bf16 %v230, %v228
    %v247 = vld [vmem:[%s5] sm:$0xff]
    %v248 = vld [vmem:[%s5 + $0x8] sm:$0xff]
    %v249 = vld [vmem:[%s5 + $0x10] sm:$0xff]
    %v250 = vld [vmem:[%s5 + $0x18] sm:$0xff]
    %v251 = vld [vmem:[%s5 + $0x20] sm:$0xff]
    %v252 = vld [vmem:[%s5 + $0x28] sm:$0xff]
    %v253 = vld [vmem:[%s5 + $0x30] sm:$0xff]
    %v254 = vld [vmem:[%s5 + $0x38] sm:$0xff]
    %256 = vset.pattern.permute.xlu0 0
    %257 = vperm.xlu0 %256, %v247
    %v258 = vpop.permute.xlu0 %257
    %261 = vset.pattern.permute.xlu0 0
    %262 = vperm.xlu0 %261, %v248
    %v263 = vpop.permute.xlu0 %262
    %266 = vset.pattern.permute.xlu0 0
    %267 = vperm.xlu0 %266, %v249
    %v268 = vpop.permute.xlu0 %267
    %271 = vset.pattern.permute.xlu0 0
    %272 = vperm.xlu0 %271, %v250
    %v273 = vpop.permute.xlu0 %272
    %276 = vset.pattern.permute.xlu0 0
    %277 = vperm.xlu0 %276, %v251
    %v278 = vpop.permute.xlu0 %277
    %281 = vset.pattern.permute.xlu0 0
    %282 = vperm.xlu0 %281, %v252
    %v283 = vpop.permute.xlu0 %282
    %286 = vset.pattern.permute.xlu0 0
    %287 = vperm.xlu0 %286, %v253
    %v288 = vpop.permute.xlu0 %287
    %291 = vset.pattern.permute.xlu0 0
    %292 = vperm.xlu0 %291, %v254
    %v293 = vpop.permute.xlu0 %292
    %v303 = vunpack.c.l.b16 %v231
    %v304 = vunpack.c.l.b16 %v232
    %v305 = vunpack.c.l.b16 %v233
    %v306 = vunpack.c.l.b16 %v234
    %v307 = vunpack.c.l.b16 %v235
    %v308 = vunpack.c.l.b16 %v236
    %v309 = vunpack.c.l.b16 %v237
    %v310 = vunpack.c.l.b16 %v238
    %v311 = vpack.c.b16 %v304, %v303
    %v312 = vpack.c.b16 %v306, %v305
    %v313 = vpack.c.b16 %v308, %v307
    %v314 = vpack.c.b16 %v310, %v309
    %vm315 = vcmask 523264
    %v317 = vsel %vm315, %v311, 0
    %v320 = vsel %vm315, %v312, 0
    %v323 = vsel %vm315, %v313, 0
    %v326 = vsel %vm315, %v314, 0
    %328 = vmatprep.subr.bf16.mxu0 0
    %329 = vmatpush1.bf16.msra.mxu0 0
    %330 = vmatprep.subr.bf16.mxu0 0
    %331 = vmatpush1.bf16.msra.mxu0 0
    %332 = vmatprep.subr.bf16.mxu0 0
    %333 = vmatpush1.bf16.msra.mxu0 0
    %334 = vmatprep.subr.bf16.mxu0 0
    %335 = vmatpush1.bf16.msra.mxu0 0
    %336 = vmatprep.subr.bf16.mxu0 %v246
    %337 = vmatpush1.bf16.msra.mxu0 %v245
    %338 = vmatprep.subr.bf16.mxu0 %v244
    %339 = vmatpush1.bf16.msra.mxu0 %v243
    %340 = vmatprep.subr.bf16.mxu0 %v242
    %341 = vmatpush1.bf16.msra.mxu0 %v241
    %342 = vmatprep.subr.bf16.mxu0 %v240
    %343 = vmatpush1.bf16.msra.mxu0 %v239
    %344 = vmatprep.subr.bf16.mxu0 0
    %345 = vmatpush2.bf16.msra.mxu0 0
    %346 = vmatprep.subr.bf16.mxu0 0
    %347 = vmatpush2.bf16.msra.mxu0 0
    %348 = vmatprep.subr.bf16.mxu0 0
    %349 = vmatpush2.bf16.msra.mxu0 0
    %350 = vmatprep.subr.bf16.mxu0 0
    %351 = vmatpush2.bf16.msra.mxu0 0
    %352 = vmatprep.subr.bf16.mxu0 0
    %353 = vmatpush2.bf16.msra.mxu0 0
    %354 = vmatprep.subr.bf16.mxu0 0
    %355 = vmatpush2.bf16.msra.mxu0 0
    %356 = vmatprep.subr.bf16.mxu0 0
    %357 = vmatpush2.bf16.msra.mxu0 0
    %358 = vmatprep.subr.bf16.mxu0 0
    %359 = vmatpush2.bf16.msra.mxu0 0
    %360 = vmatprep.mubr.bf16.mxu0 0
    %361 = vmatmul.mubr.bf16.gmra.mxu0 %v317
    %v362 = vpop.f32.mrf.mxu0
    %v363 = vadd.f32 %v258, %v362
    %v364 = vpop.f32.mrf.mxu0
    %v365 = vadd.f32 %v258, %v364
    %v366 = vpop.f32.mrf.mxu0
    %v367 = vadd.f32 %v263, %v366
    %v368 = vpop.f32.mrf.mxu0
    %v369 = vadd.f32 %v263, %v368
    %370 = vmatprep.mubr.bf16.mxu0 0
    %371 = vmatmul.mubr.bf16.gmra.mxu0 %v320
    %v372 = vpop.f32.mrf.mxu0
    %v373 = vadd.f32 %v268, %v372
    %v374 = vpop.f32.mrf.mxu0
    %v375 = vadd.f32 %v268, %v374
    %v376 = vpop.f32.mrf.mxu0
    %v377 = vadd.f32 %v273, %v376
    %v378 = vpop.f32.mrf.mxu0
    %v379 = vadd.f32 %v273, %v378
    %380 = vmatprep.mubr.bf16.mxu0 0
    %381 = vmatmul.mubr.bf16.gmra.mxu0 %v323
    %v382 = vpop.f32.mrf.mxu0
    %v383 = vadd.f32 %v278, %v382
    %v384 = vpop.f32.mrf.mxu0
    %v385 = vadd.f32 %v278, %v384
    %v386 = vpop.f32.mrf.mxu0
    %v387 = vadd.f32 %v283, %v386
    %v388 = vpop.f32.mrf.mxu0
    %v389 = vadd.f32 %v283, %v388
    %390 = vmatprep.mubr.bf16.mxu0 0
    %391 = vmatmul.mubr.bf16.gmra.mxu0 %v326
    %v392 = vpop.f32.mrf.mxu0
    %v393 = vadd.f32 %v288, %v392
    %v394 = vpop.f32.mrf.mxu0
    %v395 = vadd.f32 %v288, %v394
    %v396 = vpop.f32.mrf.mxu0
    %v397 = vadd.f32 %v293, %v396
    %v398 = vpop.f32.mrf.mxu0
    %v399 = vadd.f32 %v293, %v398
    %400 = vdwg.mxu0
    %v401 = vmax.f32 %v363, 0.0
    %v402 = vmax.f32 %v365, 0.0
    %v403 = vmax.f32 %v367, 0.0
    %v404 = vmax.f32 %v369, 0.0
    %v405 = vmax.f32 %v373, 0.0
    %v406 = vmax.f32 %v375, 0.0
    %v407 = vmax.f32 %v377, 0.0
    %v408 = vmax.f32 %v379, 0.0
    %v409 = vmax.f32 %v383, 0.0
    %v410 = vmax.f32 %v385, 0.0
    %v411 = vmax.f32 %v387, 0.0
    %v412 = vmax.f32 %v389, 0.0
    %v413 = vmax.f32 %v393, 0.0
    %v414 = vmax.f32 %v395, 0.0
    %v415 = vmax.f32 %v397, 0.0
    %v416 = vmax.f32 %v399, 0.0
    %v417 = vld [vmem:[%s3] sm:$0xff]
    %v418 = vld [vmem:[%s3 + $0x8] sm:$0xff]
    %v419 = vld [vmem:[%s3 + $0x10] sm:$0xff]
    %v420 = vld [vmem:[%s3 + $0x18] sm:$0xff]
    %v421 = vld [vmem:[%s3 + $0x20] sm:$0xff]
    %v422 = vld [vmem:[%s3 + $0x28] sm:$0xff]
    %v423 = vld [vmem:[%s3 + $0x30] sm:$0xff]
    %v424 = vld [vmem:[%s3 + $0x38] sm:$0xff]
    %426 = vset.pattern.permute.xlu0 0
    %427 = vperm.xlu0 %426, %v417
    %v428 = vpop.permute.xlu0 %427
    %431 = vset.pattern.permute.xlu0 0
    %432 = vperm.xlu0 %431, %v418
    %v433 = vpop.permute.xlu0 %432
    %436 = vset.pattern.permute.xlu0 0
    %437 = vperm.xlu0 %436, %v419
    %v438 = vpop.permute.xlu0 %437
    %441 = vset.pattern.permute.xlu0 0
    %442 = vperm.xlu0 %441, %v420
    %v443 = vpop.permute.xlu0 %442
    %446 = vset.pattern.permute.xlu0 0
    %447 = vperm.xlu0 %446, %v421
    %v448 = vpop.permute.xlu0 %447
    %451 = vset.pattern.permute.xlu0 0
    %452 = vperm.xlu0 %451, %v422
    %v453 = vpop.permute.xlu0 %452
    %456 = vset.pattern.permute.xlu0 0
    %457 = vperm.xlu0 %456, %v423
    %v458 = vpop.permute.xlu0 %457
    %461 = vset.pattern.permute.xlu0 0
    %462 = vperm.xlu0 %461, %v424
    %v463 = vpop.permute.xlu0 %462
    %v465 = vmul.f32 %v401, %v428
    %v466 = vmul.f32 %v402, %v428
    %v467 = vmul.f32 %v403, %v433
    %v468 = vmul.f32 %v404, %v433
    %v469 = vmul.f32 %v405, %v438
    %v470 = vmul.f32 %v406, %v438
    %v471 = vmul.f32 %v407, %v443
    %v472 = vmul.f32 %v408, %v443
    %v473 = vmul.f32 %v409, %v448
    %v474 = vmul.f32 %v410, %v448
    %v475 = vmul.f32 %v411, %v453
    %v476 = vmul.f32 %v412, %v453
    %v477 = vmul.f32 %v413, %v458
    %v478 = vmul.f32 %v414, %v458
    %v479 = vmul.f32 %v415, %v463
    %v480 = vmul.f32 %v416, %v463
    %v481 = vadd.f32 %v465, %v467
    %v482 = vadd.f32 %v481, %v469
    %v483 = vadd.f32 %v482, %v471
    %v484 = vadd.f32 %v483, %v473
    %v485 = vadd.f32 %v484, %v475
    %v486 = vadd.f32 %v485, %v477
    %v487 = vadd.f32 %v486, %v479
    %v488 = vrot.slane %v487, 4
    %v489 = vadd.f32 %v487, %v488
    %v490 = vrot.slane %v489, 2
    %v491 = vadd.f32 %v489, %v490
    %v492 = vrot.slane %v491, 1
    %v493 = vadd.f32 %v491, %v492
    %v494 = vadd.f32 %v466, %v468
    %v495 = vadd.f32 %v494, %v470
    %v496 = vadd.f32 %v495, %v472
    %v497 = vadd.f32 %v496, %v474
    %v498 = vadd.f32 %v497, %v476
    %v499 = vadd.f32 %v498, %v478
    %v500 = vadd.f32 %v499, %v480
    %v501 = vrot.slane %v500, 4
    %v502 = vadd.f32 %v500, %v501
    %v503 = vrot.slane %v502, 2
    %v504 = vadd.f32 %v502, %v503
    %v505 = vrot.slane %v504, 1
    %v506 = vadd.f32 %v504, %v505
    %s507 = sld [smem:[#allocation2]]
    %v508 = vstv %s507
    %v509 = vadd.f32 %v493, %v508
    %v510 = vadd.f32 %v506, %v508
    %v513 = vcombine.low %v509, %v510
    %v515 = vunpack.c.l.s4 1966171168
    %v516 = vunpack.c.0.s8 %v515
    %v517 = vlaneseq
    %v518 = vshrl.u32 %v517, 7
    %v519 = vsub.s32 %v516, %v518
    %v520 = vrot.slane %v513, %v519
    %v522 = vunpack.c.l.s4 1966171168
    %v523 = vunpack.c.0.s8 %v522
    %v524 = vlaneseq
    %v525 = vshrl.u32 %v524, 7
    %v526 = vsub.s32 %v523, %v525
    %v527 = vrot.slane %v520, %v526
    %v529 = vlaneseq
    %vm530 = vcmp.ge.s32.totalorder %v529, 0
    %vm531 = vcmp.lt.s32.totalorder %v529, 256
    %vm532 = vmand %vm530, %vm531
    %533 = vst.msk [vmem:[#allocation3] sm:$0x3] %vm532, %v527
    // Predicated region
    $region30: #{tpu_custom_call.1} parent=1 // pred_check
      _
    $region31: #{tpu_custom_call.1} parent=1 // pred_check_branch
      %535 = sbr.rel (0) target = $region33
    $region32: #{tpu_custom_call.1} parent=1 // pred_region
      %s537 = ssub.s32 32, 32
      %538 = vsyncadd [#allocation4], %s537
      %s540 = sshll.u32 [#allocation3], 4
      %s541 = int_to_ptr.vmem [resolvable:$true] %s540
      %543 = dma.vmem_to_hbm [thread:$0]  %s541, 32, %s7, [#allocation4]
    $region33: #{tpu_custom_call.1} parent=1 // pred_fallthru
      _
    // Predicated region
    $region34: #{tpu_custom_call.1} parent=1 // pred_check
      _
    $region35: #{tpu_custom_call.1} parent=1 // pred_check_branch
      %545 = sbr.rel (0) target = $region37
    $region36: #{tpu_custom_call.1} parent=1 // pred_region
      %546 = dma.done [#allocation4], 32
    $region37: #{tpu_custom_call.1} parent=1 // pred_fallthru
      _
    %547 = vsyncpa [#allocation4], 1

</llo_original>
